<compile_context>
chip_gen: v5e
topology: v5e:2x2
jax: 0.10.0
libtpu: 0.0.40
codegen_flags: <defaults>
</compile_context>

<pallas_src>
import functools

import jax
import jax.numpy as jnp
from jax.experimental import pallas as pl
from jax.experimental.pallas import tpu as pltpu


def _round_up(x, m):
    return ((x + m - 1) // m) * m


# ----------------------------------------------------------------------------
# Fused kernel: one grid step produces one lane-dense slice of the logits.
# ----------------------------------------------------------------------------
def _classifier_kernel(subj_ref, meg_ref, wm_ref, wc_ref, bias_tbl_ref, out_ref):
    """Fused MEG projection -> classifier matmul -> +folded per-subject bias.

    subj_ref:     SMEM [B]           int32  (scalar-prefetch subject ids)
    meg_ref:      VMEM [B, K2p]      f32    (flattened channels*time)
    wm_ref:       VMEM [K2p, E]      bf16   (MEG-encoder weight; bf16 DMA)
    wc_ref:       VMEM [E, Cblk]     bf16   (classifier weight slice; bf16 DMA)
    bias_tbl_ref: VMEM [S, 1, Cblk]  f32    (subj_bias@wc + bc, folded at init)
    out_ref:      VMEM [B, Cblk]     f32    (lane-dense: Cblk % 128 == 0)
    """
    B = out_ref.shape[0]

    # MEG encoder stand-in: f32 activations, bf16-stored weight upcast in-reg.
    enc = jnp.dot(meg_ref[...], wm_ref[...].astype(jnp.float32),
                  preferred_element_type=jnp.float32)                # [B, E]

    # Classifier matmul: LHS kept in f32 (no bf16 round-trip of enc).
    logits = jnp.dot(enc, wc_ref[...].astype(jnp.float32),
                     preferred_element_type=jnp.float32)             # [B, Cblk]

    # In-kernel per-subject bias gather (dynamic leading-dim index from SMEM id).
    rows = [bias_tbl_ref[subj_ref[b]] for b in range(B)]             # each [1, Cblk]
    bias = rows[0] if B == 1 else jnp.concatenate(rows, axis=0)      # [B, Cblk]

    out_ref[...] = (logits + bias).astype(out_ref.dtype)


# ----------------------------------------------------------------------------
# Model wrapper
# ----------------------------------------------------------------------------
class ClassifierModelPallas:
    """JAX/Pallas stand-in for ClassifierModel.forward(X, subject)."""

    def __init__(self, *, emb_dim=128, num_classes=1854, meg_channels=8,
                 meg_time=32, num_subjects=4, subj_dim=8, seed=0):
        assert emb_dim % 128 == 0, "keep emb_dim MXU/lane aligned"
        self.emb_dim = emb_dim
        self.num_classes = num_classes
        self.num_subjects = num_subjects

        # Two lane-aligned output blocks -> both v7x TensorCores get work.
        self.num_c_blocks = 2
        self.c_pad = _round_up(num_classes, 128 * self.num_c_blocks)
        self.c_blk = self.c_pad // self.num_c_blocks

        k2 = meg_channels * meg_time
        self.k2 = k2
        self.k2_pad = _round_up(k2, 128)

        key = jax.random.PRNGKey(seed)
        ks = jax.random.split(key, 5)

        def kaiming(k, fan_in, shape):
            # initialize_weights: nn.init.kaiming_normal_, bias = 0
            return jax.random.normal(k, shape, jnp.float32) * jnp.sqrt(2.0 / fan_in)

        # ---- MEG encoder params (subject-conditioned linear stand-in) -------
        wm = kaiming(ks[0], k2, (k2, emb_dim))
        if self.k2_pad != k2:                       # zero-pad contraction dim
            wm = jnp.pad(wm, ((0, self.k2_pad - k2), (0, 0)))
        self.wm = wm.astype(jnp.bfloat16)           # bf16 DMA, f32 upcast in kernel

        ws = kaiming(ks[1], subj_dim, (subj_dim, emb_dim))
        bm = jnp.zeros((emb_dim,), jnp.float32)
        subject_table = jax.random.normal(ks[2], (num_subjects, subj_dim),
                                          jnp.float32)
        subj_enc_bias = subject_table @ ws + bm     # [S, E] f32

        # ---- Classifier params (pretrained Linear in the reference) ---------
        wc = jax.random.normal(ks[3], (emb_dim, num_classes),
                               jnp.float32) / jnp.sqrt(emb_dim)
        bc = jax.random.normal(ks[4], (num_classes,), jnp.float32) * 0.01
        pad_c = self.c_pad - num_classes
        wc_pad = jnp.pad(wc, ((0, 0), (0, pad_c)))              # [E, Cpad] f32
        bc_pad = jnp.pad(bc, (0, pad_c))                        # [Cpad]    f32

        # Fold the per-subject encoder bias + classifier bias through wc (f32):
        #   (meg@wm + subj_bias)@wc + bc == meg@wm@wc + (subj_bias@wc + bc)
        subj_logit_bias = subj_enc_bias @ wc_pad + bc_pad[None, :]   # [S, Cpad]
        # Leading-dim layout [S, 1, Cpad] so the kernel can dynamic-index subjects.
        self.subj_logit_bias = subj_logit_bias[:, None, :]           # f32, ~32 KB

        self.wc = wc_pad.astype(jnp.bfloat16)       # bf16 DMA (dominant traffic)

    @functools.partial(jax.jit, static_argnums=0)
    def __call__(self, X, subject):
        B = X.shape[0]

        # Contiguous flatten (bitcast-level in XLA); pad contraction dim only
        # when needed (k2 = channels*time is already 128-aligned here).
        meg_flat = X.astype(jnp.float32).reshape(B, -1)              # [B, K2]
        if self.k2_pad != self.k2:
            meg_flat = jnp.pad(meg_flat, ((0, 0), (0, self.k2_pad - self.k2)))
        subject = subject.astype(jnp.int32)

        E, Cpad, K2p = self.emb_dim, self.c_pad, self.k2_pad
        cblk, nblk, S = self.c_blk, self.num_c_blocks, self.num_subjects

        flops = 2 * B * K2p * E + 2 * B * E * Cpad
        bytes_accessed = (B * K2p * 4 + K2p * E * 2 + E * Cpad * 2
                          + S * Cpad * 4 + B * 4 + B * Cpad * 4)

        grid_spec = pltpu.PrefetchScalarGridSpec(
            num_scalar_prefetch=1,                  # subject -> SMEM
            grid=(nblk,),                           # split Cpad across TCs (v7x)
            in_specs=[
                pl.BlockSpec((B, K2p), lambda i, subj: (0, 0)),        # meg (const)
                pl.BlockSpec((K2p, E), lambda i, subj: (0, 0)),        # wm  (const)
                pl.BlockSpec((E, cblk), lambda i, subj: (0, i)),       # wc slice
                pl.BlockSpec((S, 1, cblk), lambda i, subj: (0, 0, i)), # bias slice
            ],
            out_specs=pl.BlockSpec((B, cblk), lambda i, subj: (0, i)),
        )

        logits_padded = pl.pallas_call(
            _classifier_kernel,
            grid_spec=grid_spec,
            out_shape=jax.ShapeDtypeStruct((B, Cpad), jnp.float32),
            compiler_params=pltpu.CompilerParams(
                dimension_semantics=("parallel",)),
            cost_estimate=pl.CostEstimate(flops=flops, transcendentals=0,
                                          bytes_accessed=bytes_accessed),
        )(subject, meg_flat, self.wm, self.wc, self.subj_logit_bias)

        # TODO(synk): drop this slice if downstream consumers accept the
        # 128-aligned padded slab (padded columns are exactly the folded bias
        # zeros and carry no information).
        return logits_padded[:, :self.num_classes]


# ----------------------------------------------------------------------------
if __name__ == "__main__":
    key = jax.random.PRNGKey(0)
    k_meg, k_sub = jax.random.split(key, 2)

    B = 2
    X = jax.random.normal(k_meg, (B, 8, 32), jnp.float32)        # [B, channels, time]
    subject = jax.random.randint(k_sub, (B,), 0, 4, jnp.int32)   # subject ids

    model = ClassifierModelPallas(emb_dim=128, num_classes=1854,
                                  meg_channels=8, meg_time=32,
                                  num_subjects=4, subj_dim=8, seed=0)

    logits = model(X, subject)
    jax.block_until_ready(logits)

    assert logits.shape == (B, 1854)
    assert bool(jnp.all(jnp.isfinite(logits)))
    print("KERNEL_OK")
</pallas_src>

<mosaic_0001>
module attributes {stable_mosaic.version = 11 : i64} {
  func.func @_classifier_kernel(%arg0: i32, %arg1: memref<2xi32, #tpu.memory_space<smem>>, %arg2: memref<2x256xf32, #tpu.memory_space<vmem>>, %arg3: memref<256x128xbf16, #tpu.memory_space<vmem>>, %arg4: memref<128x1024xbf16, #tpu.memory_space<vmem>>, %arg5: memref<4x1x1024xf32, #tpu.memory_space<vmem>>, %arg6: memref<2x1024xf32, #tpu.memory_space<vmem>>) attributes {dimension_semantics = [#tpu.dimension_semantics<parallel>], iteration_bounds = array<i64: 2>, scalar_prefetch = 1 : i64, scratch_operands = 0 : i64, tpu.core_type = #tpu.core_type<tc>, window_params = [{pipeline_mode = #tpu.pipeline_mode<synchronous>, transform_indices = @transform_0, window_bounds = array<i64: 2, 256>}, {pipeline_mode = #tpu.pipeline_mode<synchronous>, transform_indices = @transform_1, window_bounds = array<i64: 256, 128>}, {transform_indices = @transform_2, window_bounds = array<i64: 128, 1024>}, {transform_indices = @transform_3, window_bounds = array<i64: 4, 1, 1024>}, {transform_indices = @transform_4, window_bounds = array<i64: 2, 1024>}]} {
    %c0 = arith.constant 0 : index
    %c0_0 = arith.constant 0 : index
    %0 = vector.load %arg2[%c0, %c0_0] : memref<2x256xf32, #tpu.memory_space<vmem>>, vector<2x256xf32>
    %c0_1 = arith.constant 0 : index
    %c0_2 = arith.constant 0 : index
    %1 = vector.load %arg3[%c0_1, %c0_2] : memref<256x128xbf16, #tpu.memory_space<vmem>>, vector<256x128xbf16>
    %2 = arith.extf %1 : vector<256x128xbf16> to vector<256x128xf32>
    %cst = arith.constant dense<0.000000e+00> : vector<2x128xf32>
    %3 = tpu.matmul %0, %2, %cst {dimension_numbers = #tpu.dot_dimension_numbers<[1], [0], [0], [1], [0, 0, 1, 1], [], []>} : vector<2x256xf32>, vector<256x128xf32>, vector<2x128xf32> -> vector<2x128xf32>
    %c0_3 = arith.constant 0 : index
    %c0_4 = arith.constant 0 : index
    %4 = vector.load %arg4[%c0_3, %c0_4] : memref<128x1024xbf16, #tpu.memory_space<vmem>>, vector<128x1024xbf16>
    %5 = arith.extf %4 : vector<128x1024xbf16> to vector<128x1024xf32>
    %cst_5 = arith.constant dense<0.000000e+00> : vector<2x1024xf32>
    %6 = tpu.matmul %3, %5, %cst_5 {dimension_numbers = #tpu.dot_dimension_numbers<[1], [0], [0], [1], [0, 0, 1, 1], [], []>} : vector<2x128xf32>, vector<128x1024xf32>, vector<2x1024xf32> -> vector<2x1024xf32>
    %c0_6 = arith.constant 0 : index
    %7 = memref.load %arg1[%c0_6] : memref<2xi32, #tpu.memory_space<smem>>
    %8 = arith.index_cast %7 : i32 to index
    %c0_7 = arith.constant 0 : index
    %c0_8 = arith.constant 0 : index
    %9 = vector.load %arg5[%8, %c0_7, %c0_8] : memref<4x1x1024xf32, #tpu.memory_space<vmem>>, vector<1x1x1024xf32>
    %10 = vector.shape_cast %9 : vector<1x1x1024xf32> to vector<1x1024xf32>
    %c1 = arith.constant 1 : index
    %11 = memref.load %arg1[%c1] : memref<2xi32, #tpu.memory_space<smem>>
    %12 = arith.index_cast %11 : i32 to index
    %c0_9 = arith.constant 0 : index
    %c0_10 = arith.constant 0 : index
    %13 = vector.load %arg5[%12, %c0_9, %c0_10] : memref<4x1x1024xf32, #tpu.memory_space<vmem>>, vector<1x1x1024xf32>
    %14 = vector.shape_cast %13 : vector<1x1x1024xf32> to vector<1x1024xf32>
    %15 = tpu.concatenate %10, %14 in 0 : vector<1x1024xf32>, vector<1x1024xf32> -> vector<2x1024xf32>
    %16 = arith.addf %6, %15 : vector<2x1024xf32>
    %c0_11 = arith.constant 0 : index
    %c0_12 = arith.constant 0 : index
    %17 = vector.load %arg6[%c0_11, %c0_12] : memref<2x1024xf32, #tpu.memory_space<vmem>>, vector<2x1024xf32>
    tpu.vector_store %arg6[%c0_11, %c0_12], %16 {strides = array<i32>} : memref<2x1024xf32, #tpu.memory_space<vmem>>, vector<2x1024xf32>,
    return
  }
  func.func @transform_0(%arg0: i32, %arg1: memref<2xi32, #tpu.memory_space<smem>>) -> (i32, i32) {
    %c0_i32 = arith.constant 0 : i32
    %c0_i32_0 = arith.constant 0 : i32
    %c0_i32_1 = arith.constant 0 : i32
    return %c0_i32, %c0_i32_0 : i32, i32
  }
  func.func @transform_1(%arg0: i32, %arg1: memref<2xi32, #tpu.memory_space<smem>>) -> (i32, i32) {
    %c0_i32 = arith.constant 0 : i32
    %c0_i32_0 = arith.constant 0 : i32
    %c0_i32_1 = arith.constant 0 : i32
    return %c0_i32, %c0_i32_0 : i32, i32
  }
  func.func @transform_2(%arg0: i32, %arg1: memref<2xi32, #tpu.memory_space<smem>>) -> (i32, i32) {
    %c0_i32 = arith.constant 0 : i32
    %c0_i32_0 = arith.constant 0 : i32
    return %c0_i32, %arg0 : i32, i32
  }
  func.func @transform_3(%arg0: i32, %arg1: memref<2xi32, #tpu.memory_space<smem>>) -> (i32, i32, i32) {
    %c0_i32 = arith.constant 0 : i32
    %c0_i32_0 = arith.constant 0 : i32
    %c0_i32_1 = arith.constant 0 : i32
    return %c0_i32, %c0_i32_0, %arg0 : i32, i32, i32
  }
  func.func @transform_4(%arg0: i32, %arg1: memref<2xi32, #tpu.memory_space<smem>>) -> (i32, i32) {
    %c0_i32 = arith.constant 0 : i32
    %c0_i32_0 = arith.constant 0 : i32
    return %c0_i32, %arg0 : i32, i32
  }
}

</mosaic_0001>

<llo_original>
// kernel: a_call__.1
$region0: #{a_call__.1}
  #allocation0 [shape = 'u32[]', space=smem, size = 0x4, offset = 0x4, fixed_abs, tag = 'smem constant byte address 0x4 - core index']
  #allocation1 [shape = 'u32[72,128]{1,0:T(1,128)}', space=vmem, size = 0x9000, scoped, tag = 'internal scratch']
  #allocation2 [shape = 's32[1]{0}', space=sflag, size = 0x4, scoped, tag = 'scoped memory for a_call__.1']
  #allocation3 [shape = 'u8[512]{0}', space=smem, size = 0x200, scoped, tag = 'prefetched SMEM operand 0']
  %s0 = inlined_call_operand.vmem [shape: s32[2], index: 0, kind: input, shape index: {}]
  %s1 = inlined_call_operand.vmem [shape: f32[2,256], index: 1, kind: input, shape index: {}]
  %s2 = inlined_call_operand.hbm [shape: bf16[256,128], index: 2, kind: input, shape index: {}]
  %s3 = inlined_call_operand.hbm [shape: bf16[128,2048], index: 3, kind: input, shape index: {}]
  %s4 = inlined_call_operand.hbm [shape: f32[4,1,2048], index: 4, kind: input, shape index: {}]
  %s5 = inlined_call_operand.vmem [shape: f32[2,2048], index: 5, kind: output, shape index: {}]
  %s6 = sld [smem:[#allocation0]]
  $region61: #{a_call__.1} parent=0
    _
  %s8 = ssub.s32 1, %s6
  %s9 = scalar_select 0, %s8, %s6
  %s11 = sshll.u32 %s0, 4
  %s12 = int_to_ptr.vmem [resolvable:$true] %s11
  %14 = dma.vmem_to_smem %s12, 16, [#allocation3], [#allocation2]
  %16 = dma.done [#allocation2], 16
  %17 = sfence
  $region1: #{a_call__.1} parent=0
    #allocation4 [shape = 'u8[65536]{0}', space=vmem, size = 0x10000, scoped, tag = 'input window, operand 2, single buffered']
    #allocation5 [shape = 's32[2]{0}', space=sflag, size = 0x8, scoped, tag = 'scoped memory for a_call__.1']
    #allocation6 [shape = 'u8[524288]{0}', space=vmem, size = 0x80000, scoped, tag = 'input window, operand 3']
    #allocation7 [shape = 's32[2]{0}', space=sflag, size = 0x8, scoped, tag = 'scoped memory for a_call__.1']
    #allocation8 [shape = 'u8[32768]{0}', space=vmem, size = 0x8000, scoped, tag = 'input window, operand 4']
    %18 = vsyncpa [#allocation5], 0
    %19 = vsyncpa [#allocation7], 0
    %s20 = scalar_lea.sflag [#allocation7], 1
    %21 = vsyncpa %s20, 0
    loop: start=0, step=1, limit=4
    $region2: #{a_call__.1} parent=1 // loop_pre_header
      _
    $region3: #{a_call__.1} parent=1 // loop_header
      %s23 = sphi 0, %s27
      %p24 = scmp.ge.s32.totalorder %s23, 4
      %s31 = sphi 0, %s31
      %s33 = sphi 0, %s31
      %s34 = sphi 0, %s33
      %s48 = sphi 0, %s34
      %s52 = sphi 0, %s52
      %s54 = sphi 0, %s52
      %s55 = sphi 0, %s54
      %s69 = sphi 0, %s55
      %s75 = sphi 0, %s77
      %s78 = sphi 0, %s75
      %s79 = sphi 0, %s78
      %s95 = sphi 0, %s79
      %s101 = sphi 0, %s103
      %s104 = sphi 0, %s101
      %s105 = sphi 0, %s104
      %s121 = sphi 0, %s105
      %s127 = sphi 0, %s129
      %s130 = sphi 0, %s127
      %s131 = sphi 0, %s130
      %s147 = sphi 0, %s131
    $region4: #{a_call__.1} parent=1 // loop_header_branch
      %26 = sbr.rel (%p24) target = $region8
    $region5: #{a_call__.1} parent=1 // loop_body
      %s28 = ssub.s32 %s23, 1
      %s29 = ssub.s32 %s23, 2
      %s30 = sadd.s32 %s23, 1
      %s32 = sadd.s32 %s31, 1
      %p35 = scmp.eq.s32.totalorder %s23, 1
      %p36 = scmp.ne.s32.totalorder %s31, %s33
      %p37 = scmp.eq.s32.totalorder %s23, 0
      %p38 = por %p36, %p37
      %p39 = scmp.ne.s32.totalorder %s31, %s33
      %p40 = scmp.eq.s32.totalorder %s28, 1
      %p41 = por %p39, %p40
      %p42 = scmp.ne.s32.totalorder %s33, %s34
      %p43 = scmp.eq.s32.totalorder %s28, 0
      %p44 = por %p42, %p43
      %p45 = scmp.ne.s32.totalorder %s33, %s34
      %p46 = scmp.eq.s32.totalorder %s29, 1
      %p47 = por %p45, %p46
      %p49 = scmp.ne.s32.totalorder %s34, %s48
      %p50 = scmp.eq.s32.totalorder %s29, 0
      %p51 = por %p49, %p50
      %s53 = sadd.s32 %s52, 1
      %p56 = scmp.eq.s32.totalorder %s23, 1
      %p57 = scmp.ne.s32.totalorder %s52, %s54
      %p58 = scmp.eq.s32.totalorder %s23, 0
      %p59 = por %p57, %p58
      %p60 = scmp.ne.s32.totalorder %s52, %s54
      %p61 = scmp.eq.s32.totalorder %s28, 1
      %p62 = por %p60, %p61
      %p63 = scmp.ne.s32.totalorder %s54, %s55
      %p64 = scmp.eq.s32.totalorder %s28, 0
      %p65 = por %p63, %p64
      %p66 = scmp.ne.s32.totalorder %s54, %s55
      %p67 = scmp.eq.s32.totalorder %s29, 1
      %p68 = por %p66, %p67
      %p70 = scmp.ne.s32.totalorder %s55, %s69
      %p71 = scmp.eq.s32.totalorder %s29, 0
      %p72 = por %p70, %p71
      %s73 = ssub.s32 %s23, %s30
      %p74 = scmp.eq.s32.totalorder %s73, 0
      %s76 = sadd.s32 %s75, 1
      %s77 = scalar_select %p74, %s75, %s76
      %p80 = pneg %p74
      %p81 = scmp.eq.s32.totalorder %s23, 1
      %p82 = por %p80, %p81
      %p83 = scmp.ne.s32.totalorder %s75, %s78
      %p84 = scmp.eq.s32.totalorder %s23, 0
      %p85 = por %p83, %p84
      %p86 = scmp.ne.s32.totalorder %s75, %s78
      %p87 = scmp.eq.s32.totalorder %s28, 1
      %p88 = por %p86, %p87
      %p89 = scmp.ne.s32.totalorder %s78, %s79
      %p90 = scmp.eq.s32.totalorder %s28, 0
      %p91 = por %p89, %p90
      %p92 = scmp.ne.s32.totalorder %s78, %s79
      %p93 = scmp.eq.s32.totalorder %s29, 1
      %p94 = por %p92, %p93
      %p96 = scmp.ne.s32.totalorder %s79, %s95
      %p97 = scmp.eq.s32.totalorder %s29, 0
      %p98 = por %p96, %p97
      %s99 = ssub.s32 %s23, %s30
      %p100 = scmp.eq.s32.totalorder %s99, 0
      %s102 = sadd.s32 %s101, 1
      %s103 = scalar_select %p100, %s101, %s102
      %p106 = pneg %p100
      %p107 = scmp.eq.s32.totalorder %s23, 1
      %p108 = por %p106, %p107
      %p109 = scmp.ne.s32.totalorder %s101, %s104
      %p110 = scmp.eq.s32.totalorder %s23, 0
      %p111 = por %p109, %p110
      %p112 = scmp.ne.s32.totalorder %s101, %s104
      %p113 = scmp.eq.s32.totalorder %s28, 1
      %p114 = por %p112, %p113
      %p115 = scmp.ne.s32.totalorder %s104, %s105
      %p116 = scmp.eq.s32.totalorder %s28, 0
      %p117 = por %p115, %p116
      %p118 = scmp.ne.s32.totalorder %s104, %s105
      %p119 = scmp.eq.s32.totalorder %s29, 1
      %p120 = por %p118, %p119
      %p122 = scmp.ne.s32.totalorder %s105, %s121
      %p123 = scmp.eq.s32.totalorder %s29, 0
      %p124 = por %p122, %p123
      %s125 = ssub.s32 %s23, %s30
      %p126 = scmp.eq.s32.totalorder %s125, 0
      %s128 = sadd.s32 %s127, 1
      %s129 = scalar_select %p126, %s127, %s128
      %p132 = pneg %p126
      %p133 = scmp.eq.s32.totalorder %s23, 1
      %p134 = por %p132, %p133
      %p135 = scmp.ne.s32.totalorder %s127, %s130
      %p136 = scmp.eq.s32.totalorder %s23, 0
      %p137 = por %p135, %p136
      %p138 = scmp.ne.s32.totalorder %s127, %s130
      %p139 = scmp.eq.s32.totalorder %s28, 1
      %p140 = por %p138, %p139
      %p141 = scmp.ne.s32.totalorder %s130, %s131
      %p142 = scmp.eq.s32.totalorder %s28, 0
      %p143 = por %p141, %p142
      %p144 = scmp.ne.s32.totalorder %s130, %s131
      %p145 = scmp.eq.s32.totalorder %s29, 1
      %p146 = por %p144, %p145
      %p148 = scmp.ne.s32.totalorder %s131, %s147
      %p149 = scmp.eq.s32.totalorder %s29, 0
      %p150 = por %p148, %p149
      %p151 = scmp.le.s32.totalorder 1, %s23
      %p152 = scmp.lt.s32.totalorder %s23, 3
      %p153 = pnand %p151, %p152
      %p154 = pneg %p153
      // Predicated region
      $region9: #{a_call__.1} parent=5 // pred_check
        _
      $region10: #{a_call__.1} parent=5 // pred_check_branch
        %156 = sbr.rel (%p153) target = $region12
      $region11: #{a_call__.1} parent=5 // pred_region
        %s157 = ssub.s32 %s23, 1
        // Predicated region
        $region13: #{a_call__.1} parent=11 // pred_check
          %p158 = pneg %p44
        $region14: #{a_call__.1} parent=11 // pred_check_branch
          %160 = sbr.rel (%p158) target = $region16
        $region15: #{a_call__.1} parent=11 // pred_region
          _
        $region16: #{a_call__.1} parent=11 // pred_fallthru
          _
        // Predicated region
        $region17: #{a_call__.1} parent=11 // pred_check
          %p161 = pneg %p65
        $region18: #{a_call__.1} parent=11 // pred_check_branch
          %163 = sbr.rel (%p161) target = $region20
        $region19: #{a_call__.1} parent=11 // pred_region
          %165 = vsyncadd [#allocation5], 0
          %s166 = sshll.u32 %s2, 4
          %s167 = int_to_ptr.hbm [resolvable:$true] %s166
          %s168 = sshll.u32 [#allocation4], 4
          %s169 = int_to_ptr.vmem [resolvable:$true] %s168
          %174 = dma.hbm_to_vmem [thread:$0]  %s167, 2048, %s169, [#allocation5], 64, 64, 4
        $region20: #{a_call__.1} parent=11 // pred_fallthru
          _
      $region12: #{a_call__.1} parent=5 // pred_fallthru
        _
      %p175 = scmp.lt.s32.totalorder %s23, 2
      // Predicated region
      $region21: #{a_call__.1} parent=5 // pred_check
        %p176 = pneg %p175
      $region22: #{a_call__.1} parent=5 // pred_check_branch
        %178 = sbr.rel (%p176) target = $region24
      $region23: #{a_call__.1} parent=5 // pred_region
        // Predicated region
        $region25: #{a_call__.1} parent=23 // pred_check
          %p179 = pneg %p85
        $region26: #{a_call__.1} parent=23 // pred_check_branch
          %181 = sbr.rel (%p179) target = $region28
        $region27: #{a_call__.1} parent=23 // pred_region
          %s182 = sand.u32 %s23, 1
          %s183 = scalar_lea.sflag [#allocation7], %s182
          %s184 = sand.u32 %s75, 1
          %s185 = smul.addr %s184, 512
          %s186 = scalar_lea.vmem [#allocation6], %s185
          %s187 = smul.u32 8, %s23
          %189 = vsyncadd %s183, 0
          %s190 = smul.addr %s187, 4
          %s191 = scalar_lea.hbm %s3, %s190
          %s192 = sshll.u32 %s191, 4
          %s193 = int_to_ptr.hbm [resolvable:$true] %s192
          %s194 = sshll.u32 %s186, 4
          %s195 = int_to_ptr.vmem [resolvable:$true] %s194
          %200 = dma.hbm_to_vmem [thread:$0]  %s193, 8192, %s195, %s183, 1024, 512, 32
        $region28: #{a_call__.1} parent=23 // pred_fallthru
          _
        // Predicated region
        $region29: #{a_call__.1} parent=23 // pred_check
          %p201 = pneg %p111
        $region30: #{a_call__.1} parent=23 // pred_check_branch
          %203 = sbr.rel (%p201) target = $region32
        $region31: #{a_call__.1} parent=23 // pred_region
          %s204 = sand.u32 %s23, 1
          %s205 = scalar_lea.sflag [#allocation7], %s204
          %s206 = sand.u32 %s101, 1
          %s207 = smul.addr %s206, 32
          %s208 = scalar_lea.vmem [#allocation8], %s207
          %s209 = smul.u32 8, %s23
          %211 = vsyncadd %s205, 0
          %s212 = scalar_lea.hbm %s4, %s209
          %s213 = sshll.u32 %s212, 4
          %s214 = int_to_ptr.hbm [resolvable:$true] %s213
          %s215 = sshll.u32 %s208, 4
          %s216 = int_to_ptr.vmem [resolvable:$true] %s215
          %221 = dma.hbm_to_vmem [thread:$0]  %s214, 512, %s216, %s205, 256, 128, 8
        $region32: #{a_call__.1} parent=23 // pred_fallthru
          _
      $region24: #{a_call__.1} parent=5 // pred_fallthru
        _
      %p222 = scmp.le.s32.totalorder 1, %s23
      %p223 = scmp.lt.s32.totalorder %s23, 3
      %p224 = pnand %p222, %p223
      %p225 = pneg %p224
      // Predicated region
      $region33: #{a_call__.1} parent=5 // pred_check
        _
      $region34: #{a_call__.1} parent=5 // pred_check_branch
        %227 = sbr.rel (%p224) target = $region36
      $region35: #{a_call__.1} parent=5 // pred_region
        %s228 = ssub.s32 %s23, 1
        // Predicated region
        $region37: #{a_call__.1} parent=35 // pred_check
          %p229 = pneg %p65
        $region38: #{a_call__.1} parent=35 // pred_check_branch
          %231 = sbr.rel (%p229) target = $region40
        $region39: #{a_call__.1} parent=35 // pred_region
          %233 = dma.done [#allocation5], 2048
        $region40: #{a_call__.1} parent=35 // pred_fallthru
          _
        %s234 = sand.u32 %s28, 1
        %s235 = scalar_lea.sflag [#allocation7], %s234
        %s236 = sand.u32 %s78, 1
        %s237 = smul.addr %s236, 512
        %s238 = scalar_lea.vmem [#allocation6], %s237
        // Predicated region
        $region41: #{a_call__.1} parent=35 // pred_check
          %p239 = pneg %p91
        $region42: #{a_call__.1} parent=35 // pred_check_branch
          %241 = sbr.rel (%p239) target = $region44
        $region43: #{a_call__.1} parent=35 // pred_region
          %243 = dma.done %s235, 8192
        $region44: #{a_call__.1} parent=35 // pred_fallthru
          _
        %s244 = sand.u32 %s28, 1
        %s245 = scalar_lea.sflag [#allocation7], %s244
        %s246 = sand.u32 %s104, 1
        %s247 = smul.addr %s246, 32
        %s248 = scalar_lea.vmem [#allocation8], %s247
        // Predicated region
        $region45: #{a_call__.1} parent=35 // pred_check
          %p249 = pneg %p117
        $region46: #{a_call__.1} parent=35 // pred_check_branch
          %251 = sbr.rel (%p249) target = $region48
        $region47: #{a_call__.1} parent=35 // pred_region
          %253 = dma.done %s245, 512
        $region48: #{a_call__.1} parent=35 // pred_fallthru
          _
        %p254 = pneg %p44
        %p255 = pneg %p41
        %p256 = pneg %p65
        %p257 = pneg %p62
        %s258 = sand.u32 %s28, 1
        %s259 = scalar_lea.sflag [#allocation7], %s258
        %s260 = sand.u32 %s78, 1
        %s261 = smul.addr %s260, 512
        %s262 = scalar_lea.vmem [#allocation6], %s261
        %p263 = pneg %p91
        %p264 = pneg %p88
        %s265 = sand.u32 %s28, 1
        %s266 = scalar_lea.sflag [#allocation7], %s265
        %s267 = sand.u32 %s104, 1
        %s268 = smul.addr %s267, 32
        %s269 = scalar_lea.vmem [#allocation8], %s268
        %p270 = pneg %p117
        %p271 = pneg %p114
        %p272 = pneg %p143
        %p273 = pneg %p140
        %s274 = smul.u32 8, %s28
        %p275 = scmp.lt.s32.totalorder %s274, 15
        %s276 = scalar_select %p275, %s274, 15
        %s277 = smul.addr %s276, 2
        %s278 = scalar_lea.vmem %s5, %s277
        %s279 = smul.u32 8, %s28
        %s280 = smul.u32 8, %s28
        %s281 = smul.u32 8, %s28
        %p282 = scmp.lt.s32.totalorder %s281, 15
        %s283 = scalar_select %p282, %s281, 15
        %s284 = smul.addr %s283, 2
        %s285 = scalar_lea.vmem %s5, %s284
        %s286 = smul.u32 8, %s28
        %v287 = vld [vmem:[%s1] sm:$0xf]
        %v288 = vld [vmem:[#allocation4] sm:$0xf]
        %v289 = vld [vmem:[#allocation4 + $0x4] sm:$0xf]
        %v290 = vld [vmem:[#allocation4 + $0x8] sm:$0xf]
        %v291 = vld [vmem:[#allocation4 + $0xc] sm:$0xf]
        %v292 = vld [vmem:[#allocation4 + $0x10] sm:$0xf]
        %v293 = vld [vmem:[#allocation4 + $0x14] sm:$0xf]
        %v294 = vld [vmem:[#allocation4 + $0x18] sm:$0xf]
        %v295 = vld [vmem:[#allocation4 + $0x1c] sm:$0xf]
        %v296 = vld [vmem:[#allocation4 + $0x20] sm:$0xf]
        %v297 = vld [vmem:[#allocation4 + $0x24] sm:$0xf]
        %v298 = vld [vmem:[#allocation4 + $0x28] sm:$0xf]
        %v299 = vld [vmem:[#allocation4 + $0x2c] sm:$0xf]
        %v300 = vld [vmem:[#allocation4 + $0x30] sm:$0xf]
        %v301 = vld [vmem:[#allocation4 + $0x34] sm:$0xf]
        %v302 = vld [vmem:[#allocation4 + $0x38] sm:$0xf]
        %v303 = vld [vmem:[#allocation4 + $0x3c] sm:$0xf]
        %v304 = vld [vmem:[#allocation4 + $0x40] sm:$0xf]
        %v305 = vld [vmem:[#allocation4 + $0x44] sm:$0xf]
        %v306 = vld [vmem:[#allocation4 + $0x48] sm:$0xf]
        %v307 = vld [vmem:[#allocation4 + $0x4c] sm:$0xf]
        %v308 = vld [vmem:[#allocation4 + $0x50] sm:$0xf]
        %v309 = vld [vmem:[#allocation4 + $0x54] sm:$0xf]
        %v310 = vld [vmem:[#allocation4 + $0x58] sm:$0xf]
        %v311 = vld [vmem:[#allocation4 + $0x5c] sm:$0xf]
        %v312 = vld [vmem:[#allocation4 + $0x60] sm:$0xf]
        %v313 = vld [vmem:[#allocation4 + $0x64] sm:$0xf]
        %v314 = vld [vmem:[#allocation4 + $0x68] sm:$0xf]
        %v315 = vld [vmem:[#allocation4 + $0x6c] sm:$0xf]
        %v316 = vld [vmem:[#allocation4 + $0x70] sm:$0xf]
        %v317 = vld [vmem:[#allocation4 + $0x74] sm:$0xf]
        %v318 = vld [vmem:[#allocation4 + $0x78] sm:$0xf]
        %v319 = vld [vmem:[#allocation4 + $0x7c] sm:$0xf]
        %v320 = vunpack.c.l.bf16 %v288
        %v321 = vunpack.c.l.bf16 %v289
        %v322 = vunpack.c.l.bf16 %v290
        %v323 = vunpack.c.l.bf16 %v291
        %v324 = vunpack.c.l.bf16 %v292
        %v325 = vunpack.c.l.bf16 %v293
        %v326 = vunpack.c.l.bf16 %v294
        %v327 = vunpack.c.l.bf16 %v295
        %v328 = vunpack.c.l.bf16 %v296
        %v329 = vunpack.c.l.bf16 %v297
        %v330 = vunpack.c.l.bf16 %v298
        %v331 = vunpack.c.l.bf16 %v299
        %v332 = vunpack.c.l.bf16 %v300
        %v333 = vunpack.c.l.bf16 %v301
        %v334 = vunpack.c.l.bf16 %v302
        %v335 = vunpack.c.l.bf16 %v303
        %v336 = vunpack.c.l.bf16 %v304
        %v337 = vunpack.c.l.bf16 %v305
        %v338 = vunpack.c.l.bf16 %v306
        %v339 = vunpack.c.l.bf16 %v307
        %v340 = vunpack.c.l.bf16 %v308
        %v341 = vunpack.c.l.bf16 %v309
        %v342 = vunpack.c.l.bf16 %v310
        %v343 = vunpack.c.l.bf16 %v311
        %v344 = vunpack.c.l.bf16 %v312
        %v345 = vunpack.c.l.bf16 %v313
        %v346 = vunpack.c.l.bf16 %v314
        %v347 = vunpack.c.l.bf16 %v315
        %v348 = vunpack.c.l.bf16 %v316
        %v349 = vunpack.c.l.bf16 %v317
        %v350 = vunpack.c.l.bf16 %v318
        %v351 = vunpack.c.l.bf16 %v319
        %353 = vst [vmem:[#allocation1] ss:$4 sm:$0xff] %v287
        %v354 = vld.sshfl [vmem:[#allocation1] sm:$0xff pattern:$0x73625140]
        %v355 = vld.sshfl [vmem:[#allocation1 + $0x8] sm:$0xff pattern:$0x73625140]
        %358 = vmatpush.msra.mxu0 %v335
        %359 = vmatpush.msra.mxu0 %v334
        %360 = vmatpush.msra.mxu0 %v333
        %361 = vmatpush.msra.mxu0 %v332
        %362 = vmatpush.msra.mxu0 %v331
        %363 = vmatpush.msra.mxu0 %v330
        %364 = vmatpush.msra.mxu0 %v329
        %365 = vmatpush.msra.mxu0 %v328
        %366 = vmatpush.msra.mxu0 %v327
        %367 = vmatpush.msra.mxu0 %v326
        %368 = vmatpush.msra.mxu0 %v325
        %369 = vmatpush.msra.mxu0 %v324
        %370 = vmatpush.msra.mxu0 %v323
        %371 = vmatpush.msra.mxu0 %v322
        %372 = vmatpush.msra.mxu0 %v321
        %373 = vmatpush.msra.mxu0 %v320
        %374 = vmatmul.f32.gmra.mxu0 %v354
        %v375 = vpop.f32.mrf.mxu0
        %v376 = vadd.f32 0.0, %v375
        %377 = vdwg.mxu0
        %378 = vmatpush.msra.mxu0 %v351
        %379 = vmatpush.msra.mxu0 %v350
        %380 = vmatpush.msra.mxu0 %v349
        %381 = vmatpush.msra.mxu0 %v348
        %382 = vmatpush.msra.mxu0 %v347
        %383 = vmatpush.msra.mxu0 %v346
        %384 = vmatpush.msra.mxu0 %v345
        %385 = vmatpush.msra.mxu0 %v344
        %386 = vmatpush.msra.mxu0 %v343
        %387 = vmatpush.msra.mxu0 %v342
        %388 = vmatpush.msra.mxu0 %v341
        %389 = vmatpush.msra.mxu0 %v340
        %390 = vmatpush.msra.mxu0 %v339
        %391 = vmatpush.msra.mxu0 %v338
        %392 = vmatpush.msra.mxu0 %v337
        %393 = vmatpush.msra.mxu0 %v336
        %394 = vmatmul.f32.gmra.mxu0 %v355
        %v395 = vpop.f32.mrf.mxu0
        %v396 = vadd.f32 %v376, %v395
        %397 = vdwg.mxu0
        %v398 = vld [vmem:[%s238] sm:$0xff]
        %v399 = vld [vmem:[%s238 + $0x8] sm:$0xff]
        %v400 = vld [vmem:[%s238 + $0x10] sm:$0xff]
        %v401 = vld [vmem:[%s238 + $0x18] sm:$0xff]
        %v402 = vld [vmem:[%s238 + $0x20] sm:$0xff]
        %v403 = vld [vmem:[%s238 + $0x28] sm:$0xff]
        %v404 = vld [vmem:[%s238 + $0x30] sm:$0xff]
        %v405 = vld [vmem:[%s238 + $0x38] sm:$0xff]
        %v406 = vld [vmem:[%s238 + $0x40] sm:$0xff]
        %v407 = vld [vmem:[%s238 + $0x48] sm:$0xff]
        %v408 = vld [vmem:[%s238 + $0x50] sm:$0xff]
        %v409 = vld [vmem:[%s238 + $0x58] sm:$0xff]
        %v410 = vld [vmem:[%s238 + $0x60] sm:$0xff]
        %v411 = vld [vmem:[%s238 + $0x68] sm:$0xff]
        %v412 = vld [vmem:[%s238 + $0x70] sm:$0xff]
        %v413 = vld [vmem:[%s238 + $0x78] sm:$0xff]
        %v414 = vld [vmem:[%s238 + $0x80] sm:$0xff]
        %v415 = vld [vmem:[%s238 + $0x88] sm:$0xff]
        %v416 = vld [vmem:[%s238 + $0x90] sm:$0xff]
        %v417 = vld [vmem:[%s238 + $0x98] sm:$0xff]
        %v418 = vld [vmem:[%s238 + $0xa0] sm:$0xff]
        %v419 = vld [vmem:[%s238 + $0xa8] sm:$0xff]
        %v420 = vld [vmem:[%s238 + $0xb0] sm:$0xff]
        %v421 = vld [vmem:[%s238 + $0xb8] sm:$0xff]
        %v422 = vld [vmem:[%s238 + $0xc0] sm:$0xff]
        %v423 = vld [vmem:[%s238 + $0xc8] sm:$0xff]
        %v424 = vld [vmem:[%s238 + $0xd0] sm:$0xff]
        %v425 = vld [vmem:[%s238 + $0xd8] sm:$0xff]
        %v426 = vld [vmem:[%s238 + $0xe0] sm:$0xff]
        %v427 = vld [vmem:[%s238 + $0xe8] sm:$0xff]
        %v428 = vld [vmem:[%s238 + $0xf0] sm:$0xff]
        %v429 = vld [vmem:[%s238 + $0xf8] sm:$0xff]
        %v430 = vld [vmem:[%s238 + $0x100] sm:$0xff]
        %v431 = vld [vmem:[%s238 + $0x108] sm:$0xff]
        %v432 = vld [vmem:[%s238 + $0x110] sm:$0xff]
        %v433 = vld [vmem:[%s238 + $0x118] sm:$0xff]
        %v434 = vld [vmem:[%s238 + $0x120] sm:$0xff]
        %v435 = vld [vmem:[%s238 + $0x128] sm:$0xff]
        %v436 = vld [vmem:[%s238 + $0x130] sm:$0xff]
        %v437 = vld [vmem:[%s238 + $0x138] sm:$0xff]
        %v438 = vld [vmem:[%s238 + $0x140] sm:$0xff]
        %v439 = vld [vmem:[%s238 + $0x148] sm:$0xff]
        %v440 = vld [vmem:[%s238 + $0x150] sm:$0xff]
        %v441 = vld [vmem:[%s238 + $0x158] sm:$0xff]
        %v442 = vld [vmem:[%s238 + $0x160] sm:$0xff]
        %v443 = vld [vmem:[%s238 + $0x168] sm:$0xff]
        %v444 = vld [vmem:[%s238 + $0x170] sm:$0xff]
        %v445 = vld [vmem:[%s238 + $0x178] sm:$0xff]
        %v446 = vld [vmem:[%s238 + $0x180] sm:$0xff]
        %v447 = vld [vmem:[%s238 + $0x188] sm:$0xff]
        %v448 = vld [vmem:[%s238 + $0x190] sm:$0xff]
        %v449 = vld [vmem:[%s238 + $0x198] sm:$0xff]
        %v450 = vld [vmem:[%s238 + $0x1a0] sm:$0xff]
        %v451 = vld [vmem:[%s238 + $0x1a8] sm:$0xff]
        %v452 = vld [vmem:[%s238 + $0x1b0] sm:$0xff]
        %v453 = vld [vmem:[%s238 + $0x1b8] sm:$0xff]
        %v454 = vld [vmem:[%s238 + $0x1c0] sm:$0xff]
        %v455 = vld [vmem:[%s238 + $0x1c8] sm:$0xff]
        %v456 = vld [vmem:[%s238 + $0x1d0] sm:$0xff]
        %v457 = vld [vmem:[%s238 + $0x1d8] sm:$0xff]
        %v458 = vld [vmem:[%s238 + $0x1e0] sm:$0xff]
        %v459 = vld [vmem:[%s238 + $0x1e8] sm:$0xff]
        %v460 = vld [vmem:[%s238 + $0x1f0] sm:$0xff]
        %v461 = vld [vmem:[%s238 + $0x1f8] sm:$0xff]
        %v462 = vunpack.c.l.bf16 %v398
        %v463 = vunpack.c.h.bf16 %v398
        %v464 = vunpack.c.l.bf16 %v399
        %v465 = vunpack.c.h.bf16 %v399
        %v466 = vunpack.c.l.bf16 %v400
        %v467 = vunpack.c.h.bf16 %v400
        %v468 = vunpack.c.l.bf16 %v401
        %v469 = vunpack.c.h.bf16 %v401
        %v470 = vunpack.c.l.bf16 %v402
        %v471 = vunpack.c.h.bf16 %v402
        %v472 = vunpack.c.l.bf16 %v403
        %v473 = vunpack.c.h.bf16 %v403
        %v474 = vunpack.c.l.bf16 %v404
        %v475 = vunpack.c.h.bf16 %v404
        %v476 = vunpack.c.l.bf16 %v405
        %v477 = vunpack.c.h.bf16 %v405
        %v478 = vunpack.c.l.bf16 %v406
        %v479 = vunpack.c.h.bf16 %v406
        %v480 = vunpack.c.l.bf16 %v407
        %v481 = vunpack.c.h.bf16 %v407
        %v482 = vunpack.c.l.bf16 %v408
        %v483 = vunpack.c.h.bf16 %v408
        %v484 = vunpack.c.l.bf16 %v409
        %v485 = vunpack.c.h.bf16 %v409
        %v486 = vunpack.c.l.bf16 %v410
        %v487 = vunpack.c.h.bf16 %v410
        %v488 = vunpack.c.l.bf16 %v411
        %v489 = vunpack.c.h.bf16 %v411
        %v490 = vunpack.c.l.bf16 %v412
        %v491 = vunpack.c.h.bf16 %v412
        %v492 = vunpack.c.l.bf16 %v413
        %v493 = vunpack.c.h.bf16 %v413
        %v494 = vunpack.c.l.bf16 %v414
        %v495 = vunpack.c.h.bf16 %v414
        %v496 = vunpack.c.l.bf16 %v415
        %v497 = vunpack.c.h.bf16 %v415
        %v498 = vunpack.c.l.bf16 %v416
        %v499 = vunpack.c.h.bf16 %v416
        %v500 = vunpack.c.l.bf16 %v417
        %v501 = vunpack.c.h.bf16 %v417
        %v502 = vunpack.c.l.bf16 %v418
        %v503 = vunpack.c.h.bf16 %v418
        %v504 = vunpack.c.l.bf16 %v419
        %v505 = vunpack.c.h.bf16 %v419
        %v506 = vunpack.c.l.bf16 %v420
        %v507 = vunpack.c.h.bf16 %v420
        %v508 = vunpack.c.l.bf16 %v421
        %v509 = vunpack.c.h.bf16 %v421
        %v510 = vunpack.c.l.bf16 %v422
        %v511 = vunpack.c.h.bf16 %v422
        %v512 = vunpack.c.l.bf16 %v423
        %v513 = vunpack.c.h.bf16 %v423
        %v514 = vunpack.c.l.bf16 %v424
        %v515 = vunpack.c.h.bf16 %v424
        %v516 = vunpack.c.l.bf16 %v425
        %v517 = vunpack.c.h.bf16 %v425
        %v518 = vunpack.c.l.bf16 %v426
        %v519 = vunpack.c.h.bf16 %v426
        %v520 = vunpack.c.l.bf16 %v427
        %v521 = vunpack.c.h.bf16 %v427
        %v522 = vunpack.c.l.bf16 %v428
        %v523 = vunpack.c.h.bf16 %v428
        %v524 = vunpack.c.l.bf16 %v429
        %v525 = vunpack.c.h.bf16 %v429
        %v526 = vunpack.c.l.bf16 %v430
        %v527 = vunpack.c.h.bf16 %v430
        %v528 = vunpack.c.l.bf16 %v431
        %v529 = vunpack.c.h.bf16 %v431
        %v530 = vunpack.c.l.bf16 %v432
        %v531 = vunpack.c.h.bf16 %v432
        %v532 = vunpack.c.l.bf16 %v433
        %v533 = vunpack.c.h.bf16 %v433
        %v534 = vunpack.c.l.bf16 %v434
        %v535 = vunpack.c.h.bf16 %v434
        %v536 = vunpack.c.l.bf16 %v435
        %v537 = vunpack.c.h.bf16 %v435
        %v538 = vunpack.c.l.bf16 %v436
        %v539 = vunpack.c.h.bf16 %v436
        %v540 = vunpack.c.l.bf16 %v437
        %v541 = vunpack.c.h.bf16 %v437
        %v542 = vunpack.c.l.bf16 %v438
        %v543 = vunpack.c.h.bf16 %v438
        %v544 = vunpack.c.l.bf16 %v439
        %v545 = vunpack.c.h.bf16 %v439
        %v546 = vunpack.c.l.bf16 %v440
        %v547 = vunpack.c.h.bf16 %v440
        %v548 = vunpack.c.l.bf16 %v441
        %v549 = vunpack.c.h.bf16 %v441
        %v550 = vunpack.c.l.bf16 %v442
        %v551 = vunpack.c.h.bf16 %v442
        %v552 = vunpack.c.l.bf16 %v443
        %v553 = vunpack.c.h.bf16 %v443
        %v554 = vunpack.c.l.bf16 %v444
        %v555 = vunpack.c.h.bf16 %v444
        %v556 = vunpack.c.l.bf16 %v445
        %v557 = vunpack.c.h.bf16 %v445
        %v558 = vunpack.c.l.bf16 %v446
        %v559 = vunpack.c.h.bf16 %v446
        %v560 = vunpack.c.l.bf16 %v447
        %v561 = vunpack.c.h.bf16 %v447
        %v562 = vunpack.c.l.bf16 %v448
        %v563 = vunpack.c.h.bf16 %v448
        %v564 = vunpack.c.l.bf16 %v449
        %v565 = vunpack.c.h.bf16 %v449
        %v566 = vunpack.c.l.bf16 %v450
        %v567 = vunpack.c.h.bf16 %v450
        %v568 = vunpack.c.l.bf16 %v451
        %v569 = vunpack.c.h.bf16 %v451
        %v570 = vunpack.c.l.bf16 %v452
        %v571 = vunpack.c.h.bf16 %v452
        %v572 = vunpack.c.l.bf16 %v453
        %v573 = vunpack.c.h.bf16 %v453
        %v574 = vunpack.c.l.bf16 %v454
        %v575 = vunpack.c.h.bf16 %v454
        %v576 = vunpack.c.l.bf16 %v455
        %v577 = vunpack.c.h.bf16 %v455
        %v578 = vunpack.c.l.bf16 %v456
        %v579 = vunpack.c.h.bf16 %v456
        %v580 = vunpack.c.l.bf16 %v457
        %v581 = vunpack.c.h.bf16 %v457
        %v582 = vunpack.c.l.bf16 %v458
        %v583 = vunpack.c.h.bf16 %v458
        %v584 = vunpack.c.l.bf16 %v459
        %v585 = vunpack.c.h.bf16 %v459
        %v586 = vunpack.c.l.bf16 %v460
        %v587 = vunpack.c.h.bf16 %v460
        %v588 = vunpack.c.l.bf16 %v461
        %v589 = vunpack.c.h.bf16 %v461
        %s590 = sld [smem:[#allocation3]]
        %s591 = smul.u32 %s590, 8
        %s592 = scalar_lea.vmem %s248, %s591 [#allocation8]
        %v593 = vld [vmem:[%s592] sm:$0xff]
        %s594 = sld [smem:[#allocation3 + $0x1]]
        %s595 = smul.u32 %s594, 8
        %s596 = scalar_lea.vmem %s248, %s595 [#allocation8]
        %v597 = vld [vmem:[%s596] sm:$0xff]
        %v599 = vperm.slane %v593, 0
        %v600 = vperm.slane %v593, 1
        %v601 = vperm.slane %v593, 2
        %v602 = vperm.slane %v593, 3
        %v603 = vperm.slane %v593, 4
        %v604 = vperm.slane %v593, 5
        %v605 = vperm.slane %v593, 6
        %v606 = vperm.slane %v593, 7
        %v616 = vperm.slane %v597, 0
        %v617 = vperm.slane %v597, 1
        %v618 = vperm.slane %v597, 2
        %v619 = vperm.slane %v597, 3
        %v620 = vperm.slane %v597, 4
        %v621 = vperm.slane %v597, 5
        %v622 = vperm.slane %v597, 6
        %v623 = vperm.slane %v597, 7
        %vm632 = vcmask 1040384
        %v633 = vsel %vm632, %v599, %v616
        %v634 = vsel %vm632, %v600, %v617
        %v635 = vsel %vm632, %v601, %v618
        %v636 = vsel %vm632, %v602, %v619
        %v637 = vsel %vm632, %v603, %v620
        %v638 = vsel %vm632, %v604, %v621
        %v639 = vsel %vm632, %v605, %v622
        %v640 = vsel %vm632, %v606, %v623
        %641 = vmatpush.msra.mxu0 %v582
        %642 = vmatpush.msra.mxu0 %v574
        %643 = vmatpush.msra.mxu0 %v566
        %644 = vmatpush.msra.mxu0 %v558
        %645 = vmatpush.msra.mxu0 %v550
        %646 = vmatpush.msra.mxu0 %v542
        %647 = vmatpush.msra.mxu0 %v534
        %648 = vmatpush.msra.mxu0 %v526
        %649 = vmatpush.msra.mxu0 %v518
        %650 = vmatpush.msra.mxu0 %v510
        %651 = vmatpush.msra.mxu0 %v502
        %652 = vmatpush.msra.mxu0 %v494
        %653 = vmatpush.msra.mxu0 %v486
        %654 = vmatpush.msra.mxu0 %v478
        %655 = vmatpush.msra.mxu0 %v470
        %656 = vmatpush.msra.mxu0 %v462
        %657 = vmatmul.f32.gmra.mxu0 %v396
        %v658 = vpop.f32.mrf.mxu0
        %v659 = vadd.f32 %v633, %v658
        %660 = vdwg.mxu0
        %661 = vmatpush.msra.mxu0 %v583
        %662 = vmatpush.msra.mxu0 %v575
        %663 = vmatpush.msra.mxu0 %v567
        %664 = vmatpush.msra.mxu0 %v559
        %665 = vmatpush.msra.mxu0 %v551
        %666 = vmatpush.msra.mxu0 %v543
        %667 = vmatpush.msra.mxu0 %v535
        %668 = vmatpush.msra.mxu0 %v527
        %669 = vmatpush.msra.mxu0 %v519
        %670 = vmatpush.msra.mxu0 %v511
        %671 = vmatpush.msra.mxu0 %v503
        %672 = vmatpush.msra.mxu0 %v495
        %673 = vmatpush.msra.mxu0 %v487
        %674 = vmatpush.msra.mxu0 %v479
        %675 = vmatpush.msra.mxu0 %v471
        %676 = vmatpush.msra.mxu0 %v463
        %677 = vmatmul.f32.gmra.mxu0 %v396
        %v678 = vpop.f32.mrf.mxu0
        %v679 = vadd.f32 %v634, %v678
        %680 = vdwg.mxu0
        %681 = vmatpush.msra.mxu0 %v584
        %682 = vmatpush.msra.mxu0 %v576
        %683 = vmatpush.msra.mxu0 %v568
        %684 = vmatpush.msra.mxu0 %v560
        %685 = vmatpush.msra.mxu0 %v552
        %686 = vmatpush.msra.mxu0 %v544
        %687 = vmatpush.msra.mxu0 %v536
        %688 = vmatpush.msra.mxu0 %v528
        %689 = vmatpush.msra.mxu0 %v520
        %690 = vmatpush.msra.mxu0 %v512
        %691 = vmatpush.msra.mxu0 %v504
        %692 = vmatpush.msra.mxu0 %v496
        %693 = vmatpush.msra.mxu0 %v488
        %694 = vmatpush.msra.mxu0 %v480
        %695 = vmatpush.msra.mxu0 %v472
        %696 = vmatpush.msra.mxu0 %v464
        %697 = vmatmul.f32.gmra.mxu0 %v396
        %v698 = vpop.f32.mrf.mxu0
        %v699 = vadd.f32 %v635, %v698
        %700 = vdwg.mxu0
        %701 = vmatpush.msra.mxu0 %v585
        %702 = vmatpush.msra.mxu0 %v577
        %703 = vmatpush.msra.mxu0 %v569
        %704 = vmatpush.msra.mxu0 %v561
        %705 = vmatpush.msra.mxu0 %v553
        %706 = vmatpush.msra.mxu0 %v545
        %707 = vmatpush.msra.mxu0 %v537
        %708 = vmatpush.msra.mxu0 %v529
        %709 = vmatpush.msra.mxu0 %v521
        %710 = vmatpush.msra.mxu0 %v513
        %711 = vmatpush.msra.mxu0 %v505
        %712 = vmatpush.msra.mxu0 %v497
        %713 = vmatpush.msra.mxu0 %v489
        %714 = vmatpush.msra.mxu0 %v481
        %715 = vmatpush.msra.mxu0 %v473
        %716 = vmatpush.msra.mxu0 %v465
        %717 = vmatmul.f32.gmra.mxu0 %v396
        %v718 = vpop.f32.mrf.mxu0
        %v719 = vadd.f32 %v636, %v718
        %720 = vdwg.mxu0
        %721 = vmatpush.msra.mxu0 %v586
        %722 = vmatpush.msra.mxu0 %v578
        %723 = vmatpush.msra.mxu0 %v570
        %724 = vmatpush.msra.mxu0 %v562
        %725 = vmatpush.msra.mxu0 %v554
        %726 = vmatpush.msra.mxu0 %v546
        %727 = vmatpush.msra.mxu0 %v538
        %728 = vmatpush.msra.mxu0 %v530
        %729 = vmatpush.msra.mxu0 %v522
        %730 = vmatpush.msra.mxu0 %v514
        %731 = vmatpush.msra.mxu0 %v506
        %732 = vmatpush.msra.mxu0 %v498
        %733 = vmatpush.msra.mxu0 %v490
        %734 = vmatpush.msra.mxu0 %v482
        %735 = vmatpush.msra.mxu0 %v474
        %736 = vmatpush.msra.mxu0 %v466
        %737 = vmatmul.f32.gmra.mxu0 %v396
        %v738 = vpop.f32.mrf.mxu0
        %v739 = vadd.f32 %v637, %v738
        %740 = vdwg.mxu0
        %741 = vmatpush.msra.mxu0 %v587
        %742 = vmatpush.msra.mxu0 %v579
        %743 = vmatpush.msra.mxu0 %v571
        %744 = vmatpush.msra.mxu0 %v563
        %745 = vmatpush.msra.mxu0 %v555
        %746 = vmatpush.msra.mxu0 %v547
        %747 = vmatpush.msra.mxu0 %v539
        %748 = vmatpush.msra.mxu0 %v531
        %749 = vmatpush.msra.mxu0 %v523
        %750 = vmatpush.msra.mxu0 %v515
        %751 = vmatpush.msra.mxu0 %v507
        %752 = vmatpush.msra.mxu0 %v499
        %753 = vmatpush.msra.mxu0 %v491
        %754 = vmatpush.msra.mxu0 %v483
        %755 = vmatpush.msra.mxu0 %v475
        %756 = vmatpush.msra.mxu0 %v467
        %757 = vmatmul.f32.gmra.mxu0 %v396
        %v758 = vpop.f32.mrf.mxu0
        %v759 = vadd.f32 %v638, %v758
        %760 = vdwg.mxu0
        %761 = vmatpush.msra.mxu0 %v588
        %762 = vmatpush.msra.mxu0 %v580
        %763 = vmatpush.msra.mxu0 %v572
        %764 = vmatpush.msra.mxu0 %v564
        %765 = vmatpush.msra.mxu0 %v556
        %766 = vmatpush.msra.mxu0 %v548
        %767 = vmatpush.msra.mxu0 %v540
        %768 = vmatpush.msra.mxu0 %v532
        %769 = vmatpush.msra.mxu0 %v524
        %770 = vmatpush.msra.mxu0 %v516
        %771 = vmatpush.msra.mxu0 %v508
        %772 = vmatpush.msra.mxu0 %v500
        %773 = vmatpush.msra.mxu0 %v492
        %774 = vmatpush.msra.mxu0 %v484
        %775 = vmatpush.msra.mxu0 %v476
        %776 = vmatpush.msra.mxu0 %v468
        %777 = vmatmul.f32.gmra.mxu0 %v396
        %v778 = vpop.f32.mrf.mxu0
        %v779 = vadd.f32 %v639, %v778
        %780 = vdwg.mxu0
        %781 = vmatpush.msra.mxu0 %v589
        %782 = vmatpush.msra.mxu0 %v581
        %783 = vmatpush.msra.mxu0 %v573
        %784 = vmatpush.msra.mxu0 %v565
        %785 = vmatpush.msra.mxu0 %v557
        %786 = vmatpush.msra.mxu0 %v549
        %787 = vmatpush.msra.mxu0 %v541
        %788 = vmatpush.msra.mxu0 %v533
        %789 = vmatpush.msra.mxu0 %v525
        %790 = vmatpush.msra.mxu0 %v517
        %791 = vmatpush.msra.mxu0 %v509
        %792 = vmatpush.msra.mxu0 %v501
        %793 = vmatpush.msra.mxu0 %v493
        %794 = vmatpush.msra.mxu0 %v485
        %795 = vmatpush.msra.mxu0 %v477
        %796 = vmatpush.msra.mxu0 %v469
        %797 = vmatmul.f32.gmra.mxu0 %v396
        %v798 = vpop.f32.mrf.mxu0
        %v799 = vadd.f32 %v640, %v798
        %800 = vdwg.mxu0
        %v809 = vrot.slane %v679, 6
        %v810 = vrot.slane %v699, 4
        %v811 = vrot.slane %v719, 2
        %v812 = vrot.slane %v759, 6
        %v813 = vrot.slane %v779, 4
        %v814 = vrot.slane %v799, 2
        %vm815 = vcmask 1041408
        %v816 = vsel %vm815, %v659, %v809
        %vm817 = vcmask 1045508
        %v818 = vsel %vm817, %v810, %v811
        %vm819 = vcmask 1043456
        %v820 = vsel %vm819, %v816, %v818
        %v821 = vsel %vm815, %v739, %v812
        %v822 = vsel %vm817, %v813, %v814
        %v823 = vsel %vm819, %v821, %v822
        %826 = vst [vmem:[%s285] sm:$0xff] %v820
        %827 = vst [vmem:[%s285 + $0x8] sm:$0xff] %v823
        %s828 = smul.u32 8, %s28
        %p829 = scmp.lt.s32.totalorder %s828, 15
        %s830 = scalar_select %p829, %s828, 15
        %s831 = smul.addr %s830, 2
        %s832 = scalar_lea.vmem %s5, %s831
        // Predicated region
        $region49: #{a_call__.1} parent=35 // pred_check
          %p833 = pneg %p140
        $region50: #{a_call__.1} parent=35 // pred_check_branch
          %835 = sbr.rel (%p833) target = $region52
        $region51: #{a_call__.1} parent=35 // pred_region
          %s836 = smul.u32 8, %s28
        $region52: #{a_call__.1} parent=35 // pred_fallthru
          _
      $region36: #{a_call__.1} parent=5 // pred_fallthru
        _
      %p837 = scmp.le.s32.totalorder 2, %s23
      // Predicated region
      $region53: #{a_call__.1} parent=5 // pred_check
        %p838 = pneg %p837
      $region54: #{a_call__.1} parent=5 // pred_check_branch
        %840 = sbr.rel (%p838) target = $region56
      $region55: #{a_call__.1} parent=5 // pred_region
        %s841 = ssub.s32 %s23, 2
        // Predicated region
        $region57: #{a_call__.1} parent=55 // pred_check
          %p842 = pneg %p146
        $region58: #{a_call__.1} parent=55 // pred_check_branch
          %844 = sbr.rel (%p842) target = $region60
        $region59: #{a_call__.1} parent=55 // pred_region
          %s845 = smul.u32 8, %s29
          %p846 = scmp.lt.s32.totalorder %s845, 15
          %s847 = scalar_select %p846, %s845, 15
          %s848 = smul.addr %s847, 2
          %s849 = scalar_lea.vmem %s5, %s848
        $region60: #{a_call__.1} parent=55 // pred_fallthru
          _
      $region56: #{a_call__.1} parent=5 // pred_fallthru
        _
    $region6: #{a_call__.1} parent=1 // loop_footer
      %s27 = sadd.s32 1, %s23
    $region7: #{a_call__.1} parent=1 // loop_footer_branch
      %22 = sbr.rel target = $region3
    $region8: #{a_call__.1} parent=1 // loop_exit
      _
    %850 = vsyncpa [#allocation5], 1
    %s851 = scalar_lea.sflag [#allocation5], 1
    %852 = vsyncpa %s851, 1
    %853 = vsyncpa [#allocation7], 1
    %s854 = scalar_lea.sflag [#allocation7], 1
    %855 = vsyncpa %s854, 1

</llo_original>
